<compile_context>
chip_gen: v7x
topology: tpu7x:2x2x1
jax: 0.10.0
libtpu: 0.0.40
codegen_flags: <defaults>
</compile_context>

<pallas_src>
import functools

import jax
import jax.numpy as jnp
from jax.experimental import pallas as pl
from jax.experimental.pallas import tpu as pltpu

_LANES = 128


def _round_up(x, m):
    return (x + m - 1) // m * m


def _pick_bt(B, N):
    """Batches per row tile: one grid step for small problems, otherwise tiles
    of <=512 rows sharded across TensorCores via the 'parallel' grid axis."""
    if B * N <= 512:
        return B
    for bt in range(min(B, max(1, 512 // N)), 0, -1):
        if B % bt == 0 and bt % 8 == 0 and (bt * N) % 16 == 0:
            return bt
    return B


def pack_params(params, d_ent, d_sym):
    """Pack all weights/biases into one (rows, 128) bf16 slab, zero padded.

    Zero padding is numerically inert: padded output lanes stay 0 through ReLU
    and the max, and the next layer's weight rows for those lanes are 0.
    All block offsets / row counts are multiples of 16 (bf16 sublane tile).
    Returns (slab, offsets, dims).
    """
    d_ent_pad = _round_up(d_ent, 16)
    d_sym_pad = _round_up(d_sym, 16)
    d_in = d_ent_pad + d_sym_pad            # fused [ent | fg] input width

    def blockify(w, rows, row_off=0):
        blk = jnp.zeros((rows, _LANES), jnp.float32)
        r, c = w.shape
        return blk.at[row_off:row_off + r, :c].set(w.astype(jnp.float32))

    blocks, off, row = [], {}, 0

    def add(name, blk):
        nonlocal row
        blocks.append(blk)
        off[name] = (row, row + blk.shape[0])
        row += blk.shape[0]

    # First layer weights read the full fused input; unused rows are zero.
    add('w_in_sym', blockify(params['w_sym'], d_in, row_off=d_ent_pad))
    add('w_in_ent', blockify(params['w_re1e'], d_in, row_off=0))
    add('w_re1s', blockify(params['w_re1s'], _round_up(params['w_re1s'].shape[0], 16)))
    add('w_re2', blockify(params['w_re2'], _round_up(params['w_re2'].shape[0], 16)))
    add('w_r1', blockify(params['w_r1'], _round_up(params['w_r1'].shape[0], 16)))
    add('w_r2', blockify(params['w_r2'], _round_up(params['w_r2'].shape[0], 16)))

    bias_blk = jnp.zeros((16, _LANES), jnp.float32)
    for i, name in enumerate(('b_sym', 'b_re1', 'b_re2', 'b_r1', 'b_r2')):
        b = params[name].reshape(-1).astype(jnp.float32)
        bias_blk = bias_blk.at[i, :b.shape[0]].set(b)
    add('bias', bias_blk)

    slab = jnp.concatenate(blocks, axis=0).astype(jnp.bfloat16)
    dims = {
        'd_in': d_in,
        'd_ent_pad': d_ent_pad,
        'd_sym_pad': d_sym_pad,
        'k_re1s': off['w_re1s'][1] - off['w_re1s'][0],
        'k_r1': off['w_r1'][1] - off['w_r1'][0],
        'k_r2': off['w_r2'][1] - off['w_r2'][0],
    }
    return slab, off, dims


def reachable_kernel(x_ref, w_ref, out_ref, *, n_ent, off, k_re1s, k_r1, k_r2):
    f32, bf16 = jnp.float32, jnp.bfloat16

    def W(name):
        lo, hi = off[name]
        return w_ref[lo:hi, :]                 # static, 16-row-aligned slice (bf16)

    x = x_ref[...]                             # (bt*N, d_in) bf16, fused [ent | fg]
    biases = W('bias').astype(f32)             # (16, 128) loaded once, kept f32

    def b(i):
        return biases[i:i + 1, :]              # (1, 128), broadcasts over rows

    # symbol encoder: Linear + ReLU (ent rows of w_in_sym are zero)
    sym = jnp.maximum(
        jnp.dot(x, W('w_in_sym'), preferred_element_type=f32) + b(0), 0.0)

    # reachable encoder L1: Linear(cat([ent, sym])) + ReLU as split-weight matmul
    # (fg rows of w_in_ent are zero; sym contributes through its real 32 lanes)
    h1 = jnp.maximum(
        jnp.dot(x, W('w_in_ent'), preferred_element_type=f32)
        + jnp.dot(sym[:, :k_re1s].astype(bf16), W('w_re1s'),
                  preferred_element_type=f32)
        + b(1), 0.0)                           # (bt*N, 128)

    # reachable encoder L2: Linear + ReLU
    h2 = jnp.maximum(
        jnp.dot(h1.astype(bf16), W('w_re2'), preferred_element_type=f32)
        + b(2), 0.0)

    # torch.max over the entity dim (values only)
    bt = h2.shape[0] // n_ent
    red = jnp.max(h2.reshape(bt, n_ent, _LANES), axis=1)       # (bt, 128)

    # head: Linear + ReLU, Linear
    o1 = jnp.maximum(
        jnp.dot(red[:, :k_r1].astype(bf16), W('w_r1'),
                preferred_element_type=f32) + b(3), 0.0)
    out = jnp.dot(o1[:, :k_r2].astype(bf16), W('w_r2'),
                  preferred_element_type=f32) + b(4)

    out_ref[...] = out.astype(out_ref.dtype)   # lane-dense (bt, 128) store


def reachable_net_pallas(entity_enc, focus_goal, params):
    """entity_enc: (B, N, 2*feat); focus_goal: (B, N, 3, symbol_size)."""
    B, N, d_ent = entity_enc.shape
    fg = focus_goal.reshape(B, N, -1)          # tu.flatten(..., begin_axis=2)
    d_sym = fg.shape[-1]

    w_slab, off, dims = pack_params(params, d_ent, d_sym)
    d_in, d_ent_pad = dims['d_in'], dims['d_ent_pad']

    # One fused, lane-padded bf16 activation input: [ent | fg] per row.
    x_in = jnp.zeros((B * N, d_in), jnp.float32)
    x_in = x_in.at[:, :d_ent].set(entity_enc.reshape(B * N, d_ent))
    x_in = x_in.at[:, d_ent_pad:d_ent_pad + d_sym].set(fg.reshape(B * N, d_sym))
    x_in = x_in.astype(jnp.bfloat16)

    bt = _pick_bt(B, N)                        # batches per row tile
    grid = (B // bt,)
    rows_tile = bt * N

    kernel = functools.partial(
        reachable_kernel, n_ent=N, off=off,
        k_re1s=dims['k_re1s'], k_r1=dims['k_r1'], k_r2=dims['k_r2'])

    flops = (2 * B * N * _LANES * (2 * d_in + dims['k_re1s'] + _LANES)
             + 2 * B * _LANES * (dims['k_r1'] + dims['k_r2']))
    bytes_accessed = 2 * (x_in.size + w_slab.size) + 4 * B * _LANES

    out_pad = pl.pallas_call(
        kernel,
        out_shape=jax.ShapeDtypeStruct((B, _LANES), jnp.float32),
        grid=grid,
        in_specs=[
            pl.BlockSpec((rows_tile, d_in), lambda i: (i, 0)),
            # constant index_map -> slab DMA'd once, VMEM-resident across tiles
            pl.BlockSpec(w_slab.shape, lambda i: (0, 0)),
        ],
        out_specs=pl.BlockSpec((bt, _LANES), lambda i: (i, 0)),
        compiler_params=pltpu.CompilerParams(
            dimension_semantics=("parallel",)),
        cost_estimate=pl.CostEstimate(flops=int(flops), transcendentals=0,
                                      bytes_accessed=int(bytes_accessed)),
    )(x_in, w_slab)

    return out_pad[:, :2]                      # real logits; padded lanes are 0


def reachable_net_ref(entity_enc, focus_goal, params):
    """Pure-JAX f32 reference mirroring the PyTorch forward."""
    B, N = entity_enc.shape[:2]
    fg = focus_goal.reshape(B, N, -1)
    sym = jax.nn.relu(fg @ params['w_sym'] + params['b_sym'])
    x = jnp.concatenate([entity_enc, sym], axis=-1)
    w_re1 = jnp.concatenate([params['w_re1e'], params['w_re1s']], axis=0)
    h1 = jax.nn.relu(x @ w_re1 + params['b_re1'])
    h2 = jax.nn.relu(h1 @ params['w_re2'] + params['b_re2'])
    red = jnp.max(h2, axis=-2)
    o1 = jax.nn.relu(red @ params['w_r1'] + params['b_r1'])
    return o1 @ params['w_r2'] + params['b_r2']


def reachable_net_ref_bf16(entity_enc, focus_goal, params):
    """Reference mirroring the kernel's bf16-operand / f32-accumulate math."""
    bf16, f32 = jnp.bfloat16, jnp.float32

    def dot(a, w):
        return jnp.dot(a.astype(bf16), w.astype(bf16), preferred_element_type=f32)

    def bias(name):
        return params[name].astype(bf16).astype(f32)

    B, N = entity_enc.shape[:2]
    fg = focus_goal.reshape(B * N, -1)
    ent = entity_enc.reshape(B * N, -1)
    sym = jax.nn.relu(dot(fg, params['w_sym']) + bias('b_sym'))
    h1 = jax.nn.relu(dot(ent, params['w_re1e'])
                     + dot(sym, params['w_re1s']) + bias('b_re1'))
    h2 = jax.nn.relu(dot(h1, params['w_re2']) + bias('b_re2'))
    red = jnp.max(h2.reshape(B, N, -1), axis=1)
    o1 = jax.nn.relu(dot(red, params['w_r1']) + bias('b_r1'))
    return dot(o1, params['w_r2']) + bias('b_r2')


def init_params(key, feat_size, symbol_size, symbol_enc_size=32):
    d_ent = feat_size * 2
    d_sym_in = symbol_size * 3
    ks = jax.random.split(key, 12)

    def lin(k, din, dout):
        scale = 1.0 / jnp.sqrt(jnp.float32(din))
        return jax.random.uniform(k, (din, dout), jnp.float32, -scale, scale)

    return {
        'w_sym': lin(ks[0], d_sym_in, symbol_enc_size),
        'b_sym': jax.random.uniform(ks[1], (1, symbol_enc_size), jnp.float32, -0.1, 0.1),
        'w_re1e': lin(ks[2], d_ent, 128),
        'w_re1s': lin(ks[3], symbol_enc_size, 128),
        'b_re1': jax.random.uniform(ks[4], (1, 128), jnp.float32, -0.1, 0.1),
        'w_re2': lin(ks[5], 128, 64),
        'b_re2': jax.random.uniform(ks[6], (1, 64), jnp.float32, -0.1, 0.1),
        'w_r1': lin(ks[7], 64, 64),
        'b_r1': jax.random.uniform(ks[8], (1, 64), jnp.float32, -0.1, 0.1),
        'w_r2': lin(ks[9], 64, 2),
        'b_r2': jax.random.uniform(ks[10], (1, 2), jnp.float32, -0.1, 0.1),
    }


if __name__ == "__main__":
    B, N = 2, 8
    feat_size, symbol_size, symbol_enc_size = 16, 4, 32

    key = jax.random.PRNGKey(0)
    k_ent, k_fg, k_par = jax.random.split(key, 3)

    entity_enc = jax.random.normal(k_ent, (B, N, feat_size * 2), jnp.float32)
    focus_goal = jax.random.normal(k_fg, (B, N, 3, symbol_size), jnp.float32)
    params = init_params(k_par, feat_size, symbol_size, symbol_enc_size)

    out = jax.block_until_ready(reachable_net_pallas(entity_enc, focus_goal, params))
    assert out.shape == (B, 2), out.shape

    # Tight check against a reference that mirrors the kernel's bf16 arithmetic.
    ref_bf16 = reachable_net_ref_bf16(entity_enc, focus_goal, params)
    assert jnp.allclose(out, ref_bf16, atol=1e-2, rtol=1e-2), (out, ref_bf16)

    # Loose check against the exact f32 module semantics (bf16 operand rounding).
    ref_f32 = reachable_net_ref(entity_enc, focus_goal, params)
    assert jnp.allclose(out, ref_f32, atol=1e-1, rtol=1e-1), (out, ref_f32)

    print("KERNEL_OK")
</pallas_src>

<mosaic_0001>
module attributes {stable_mosaic.version = 11 : i64} {
  func.func @reachable_kernel(%arg0: i32, %arg1: memref<16x48xbf16, #tpu.memory_space<vmem>>, %arg2: memref<400x128xbf16, #tpu.memory_space<vmem>>, %arg3: memref<2x128xf32, #tpu.memory_space<vmem>>) attributes {dimension_semantics = [#tpu.dimension_semantics<parallel>], iteration_bounds = array<i64: 1>, scalar_prefetch = 0 : i64, scratch_operands = 0 : i64, tpu.core_type = #tpu.core_type<tc>, window_params = [{transform_indices = @transform_0, window_bounds = array<i64: 16, 48>}, {pipeline_mode = #tpu.pipeline_mode<synchronous>, transform_indices = @transform_1, window_bounds = array<i64: 400, 128>}, {transform_indices = @transform_2, window_bounds = array<i64: 2, 128>}]} {
    %c0 = arith.constant 0 : index
    %c0_0 = arith.constant 0 : index
    %0 = vector.load %arg1[%c0, %c0_0] : memref<16x48xbf16, #tpu.memory_space<vmem>>, vector<16x48xbf16>
    %c384 = arith.constant 384 : index
    %c0_1 = arith.constant 0 : index
    %1 = vector.load %arg2[%c384, %c0_1] : memref<400x128xbf16, #tpu.memory_space<vmem>>, vector<16x128xbf16>
    %2 = arith.extf %1 : vector<16x128xbf16> to vector<16x128xf32>
    %c0_2 = arith.constant 0 : index
    %c0_3 = arith.constant 0 : index
    %3 = vector.load %arg2[%c0_2, %c0_3] : memref<400x128xbf16, #tpu.memory_space<vmem>>, vector<48x128xbf16>
    %cst = arith.constant dense<0.000000e+00> : vector<16x128xf32>
    %4 = tpu.matmul %0, %3, %cst {dimension_numbers = #tpu.dot_dimension_numbers<[1], [0], [0], [1], [0, 0, 1, 1], [], []>} : vector<16x48xbf16>, vector<48x128xbf16>, vector<16x128xf32> -> vector<16x128xf32>
    %5 = vector.extract_strided_slice %2 {offsets = [0, 0], sizes = [1, 128], strides = [1, 1]} : vector<16x128xf32> to vector<1x128xf32>
    %6 = vector.broadcast %5 : vector<1x128xf32> to vector<16x128xf32>
    %7 = arith.addf %4, %6 : vector<16x128xf32>
    %cst_4 = arith.constant 0.000000e+00 : f32
    %8 = vector.broadcast %cst_4 : f32 to vector<16x128xf32>
    %9 = arith.maximumf %7, %8 : vector<16x128xf32>
    %c48 = arith.constant 48 : index
    %c0_5 = arith.constant 0 : index
    %10 = vector.load %arg2[%c48, %c0_5] : memref<400x128xbf16, #tpu.memory_space<vmem>>, vector<48x128xbf16>
    %cst_6 = arith.constant dense<0.000000e+00> : vector<16x128xf32>
    %11 = tpu.matmul %0, %10, %cst_6 {dimension_numbers = #tpu.dot_dimension_numbers<[1], [0], [0], [1], [0, 0, 1, 1], [], []>} : vector<16x48xbf16>, vector<48x128xbf16>, vector<16x128xf32> -> vector<16x128xf32>
    %12 = vector.extract_strided_slice %9 {offsets = [0, 0], sizes = [16, 32], strides = [1, 1]} : vector<16x128xf32> to vector<16x32xf32>
    %13 = arith.truncf %12 : vector<16x32xf32> to vector<16x32xbf16>
    %c96 = arith.constant 96 : index
    %c0_7 = arith.constant 0 : index
    %14 = vector.load %arg2[%c96, %c0_7] : memref<400x128xbf16, #tpu.memory_space<vmem>>, vector<32x128xbf16>
    %cst_8 = arith.constant dense<0.000000e+00> : vector<16x128xf32>
    %15 = tpu.matmul %13, %14, %cst_8 {dimension_numbers = #tpu.dot_dimension_numbers<[1], [0], [0], [1], [0, 0, 1, 1], [], []>} : vector<16x32xbf16>, vector<32x128xbf16>, vector<16x128xf32> -> vector<16x128xf32>
    %16 = arith.addf %11, %15 : vector<16x128xf32>
    %17 = vector.extract_strided_slice %2 {offsets = [1, 0], sizes = [1, 128], strides = [1, 1]} : vector<16x128xf32> to vector<1x128xf32>
    %18 = vector.broadcast %17 : vector<1x128xf32> to vector<16x128xf32>
    %19 = arith.addf %16, %18 : vector<16x128xf32>
    %cst_9 = arith.constant 0.000000e+00 : f32
    %20 = vector.broadcast %cst_9 : f32 to vector<16x128xf32>
    %21 = arith.maximumf %19, %20 : vector<16x128xf32>
    %22 = arith.truncf %21 : vector<16x128xf32> to vector<16x128xbf16>
    %c128 = arith.constant 128 : index
    %c0_10 = arith.constant 0 : index
    %23 = vector.load %arg2[%c128, %c0_10] : memref<400x128xbf16, #tpu.memory_space<vmem>>, vector<128x128xbf16>
    %cst_11 = arith.constant dense<0.000000e+00> : vector<16x128xf32>
    %24 = tpu.matmul %22, %23, %cst_11 {dimension_numbers = #tpu.dot_dimension_numbers<[1], [0], [0], [1], [0, 0, 1, 1], [], []>} : vector<16x128xbf16>, vector<128x128xbf16>, vector<16x128xf32> -> vector<16x128xf32>
    %25 = vector.extract_strided_slice %2 {offsets = [2, 0], sizes = [1, 128], strides = [1, 1]} : vector<16x128xf32> to vector<1x128xf32>
    %26 = vector.broadcast %25 : vector<1x128xf32> to vector<16x128xf32>
    %27 = arith.addf %24, %26 : vector<16x128xf32>
    %cst_12 = arith.constant 0.000000e+00 : f32
    %28 = vector.broadcast %cst_12 : f32 to vector<16x128xf32>
    %29 = arith.maximumf %27, %28 : vector<16x128xf32>
    %30 = vector.shape_cast %29 : vector<16x128xf32> to vector<2x8x128xf32>
    %cst_13 = arith.constant dense<0xFF800000> : vector<2x128xf32>
    %31 = vector.multi_reduction <maximumf>, %30, %cst_13 [1] : vector<2x8x128xf32> to vector<2x128xf32>
    %32 = vector.extract_strided_slice %31 {offsets = [0, 0], sizes = [2, 64], strides = [1, 1]} : vector<2x128xf32> to vector<2x64xf32>
    %33 = arith.truncf %32 : vector<2x64xf32> to vector<2x64xbf16>
    %c256 = arith.constant 256 : index
    %c0_14 = arith.constant 0 : index
    %34 = vector.load %arg2[%c256, %c0_14] : memref<400x128xbf16, #tpu.memory_space<vmem>>, vector<64x128xbf16>
    %cst_15 = arith.constant dense<0.000000e+00> : vector<2x128xf32>
    %35 = tpu.matmul %33, %34, %cst_15 {dimension_numbers = #tpu.dot_dimension_numbers<[1], [0], [0], [1], [0, 0, 1, 1], [], []>} : vector<2x64xbf16>, vector<64x128xbf16>, vector<2x128xf32> -> vector<2x128xf32>
    %36 = vector.extract_strided_slice %2 {offsets = [3, 0], sizes = [1, 128], strides = [1, 1]} : vector<16x128xf32> to vector<1x128xf32>
    %37 = vector.broadcast %36 : vector<1x128xf32> to vector<2x128xf32>
    %38 = arith.addf %35, %37 : vector<2x128xf32>
    %cst_16 = arith.constant 0.000000e+00 : f32
    %39 = vector.broadcast %cst_16 : f32 to vector<2x128xf32>
    %40 = arith.maximumf %38, %39 : vector<2x128xf32>
    %41 = vector.extract_strided_slice %40 {offsets = [0, 0], sizes = [2, 64], strides = [1, 1]} : vector<2x128xf32> to vector<2x64xf32>
    %42 = arith.truncf %41 : vector<2x64xf32> to vector<2x64xbf16>
    %c320 = arith.constant 320 : index
    %c0_17 = arith.constant 0 : index
    %43 = vector.load %arg2[%c320, %c0_17] : memref<400x128xbf16, #tpu.memory_space<vmem>>, vector<64x128xbf16>
    %cst_18 = arith.constant dense<0.000000e+00> : vector<2x128xf32>
    %44 = tpu.matmul %42, %43, %cst_18 {dimension_numbers = #tpu.dot_dimension_numbers<[1], [0], [0], [1], [0, 0, 1, 1], [], []>} : vector<2x64xbf16>, vector<64x128xbf16>, vector<2x128xf32> -> vector<2x128xf32>
    %45 = vector.extract_strided_slice %2 {offsets = [4, 0], sizes = [1, 128], strides = [1, 1]} : vector<16x128xf32> to vector<1x128xf32>
    %46 = vector.broadcast %45 : vector<1x128xf32> to vector<2x128xf32>
    %47 = arith.addf %44, %46 : vector<2x128xf32>
    %c0_19 = arith.constant 0 : index
    %c0_20 = arith.constant 0 : index
    %48 = vector.load %arg3[%c0_19, %c0_20] : memref<2x128xf32, #tpu.memory_space<vmem>>, vector<2x128xf32>
    tpu.vector_store %arg3[%c0_19, %c0_20], %47 {strides = array<i32>} : memref<2x128xf32, #tpu.memory_space<vmem>>, vector<2x128xf32>,
    return
  }
  func.func @transform_0(%arg0: i32) -> (i32, i32) {
    %c0_i32 = arith.constant 0 : i32
    %c0_i32_0 = arith.constant 0 : i32
    return %arg0, %c0_i32 : i32, i32
  }
  func.func @transform_1(%arg0: i32) -> (i32, i32) {
    %c0_i32 = arith.constant 0 : i32
    %c0_i32_0 = arith.constant 0 : i32
    %c0_i32_1 = arith.constant 0 : i32
    return %c0_i32, %c0_i32_0 : i32, i32
  }
  func.func @transform_2(%arg0: i32) -> (i32, i32) {
    %c0_i32 = arith.constant 0 : i32
    %c0_i32_0 = arith.constant 0 : i32
    return %arg0, %c0_i32 : i32, i32
  }
}

</mosaic_0001>

<llo_original>
// kernel: tpu_custom_call.1
$region0: #{tpu_custom_call.1}
  #allocation0 [shape = 'u32[]', space=smem, size = 0x4, offset = 0x4, fixed_abs, tag = 'smem constant byte address 0x4 - core index']
  #allocation1 [shape = 'u32[144,128]{1,0:T(1,128)}', space=vmem, size = 0x12000, scoped, tag = 'internal scratch']
  %s0 = inlined_call_operand.hbm [shape: bf16[16,48], index: 0, kind: input, shape index: {}]
  %s1 = inlined_call_operand.hbm [shape: bf16[400,128], index: 1, kind: input, shape index: {}]
  %s2 = inlined_call_operand.hbm [shape: f32[2,128], index: 2, kind: output, shape index: {}]
  %s3 = sld [smem:[#allocation0]]
  $region26: #{tpu_custom_call.1} parent=0
    _
  %s5 = ssub.s32 1, %s3
  %s6 = scalar_select 0, %s5, %s3
  $region1: #{tpu_custom_call.1} parent=0
    #allocation2 [shape = 'u8[4096]{0}', space=vmem, size = 0x1000, scoped, tag = 'input window, operand 0, single buffered']
    #allocation3 [shape = 's32[1]{0}', space=sflag, size = 0x4, scoped, tag = 'scoped memory for tpu_custom_call.1']
    #allocation4 [shape = 's32[1]{0}', space=sflag, size = 0x4, scoped, tag = 'scoped memory for tpu_custom_call.1']
    #allocation5 [shape = 'u8[102400]{0}', space=vmem, size = 0x19000, scoped, tag = 'input window, operand 1, single buffered']
    #allocation6 [shape = 's32[1]{0}', space=sflag, size = 0x4, scoped, tag = 'scoped memory for tpu_custom_call.1']
    #allocation7 [shape = 'u8[1024]{0}', space=vmem, size = 0x400, scoped, tag = 'output window, operand 0, single buffered']
    %7 = vsyncpa [#allocation3], 0
    %8 = vsyncpa [#allocation6], 0
    %9 = vsyncpa [#allocation4], 0
    // Predicated region
    $region2: #{tpu_custom_call.1} parent=1 // pred_check
      _
    $region3: #{tpu_custom_call.1} parent=1 // pred_check_branch
      %11 = sbr.rel (0) target = $region5
    $region4: #{tpu_custom_call.1} parent=1 // pred_region
      %s13 = ssub.s32 128, 128
      %14 = vsyncadd [#allocation3], %s13
      %s15 = sshll.u32 [#allocation2], 4
      %s16 = int_to_ptr.vmem [resolvable:$true] %s15
      %21 = dma.hbm_to_vmem [thread:$0]  %s0, 128, %s16, [#allocation3], 64, 64, 4
    $region5: #{tpu_custom_call.1} parent=1 // pred_fallthru
      _
    // Predicated region
    $region6: #{tpu_custom_call.1} parent=1 // pred_check
      _
    $region7: #{tpu_custom_call.1} parent=1 // pred_check_branch
      %23 = sbr.rel (0) target = $region9
    $region8: #{tpu_custom_call.1} parent=1 // pred_region
      %s25 = ssub.s32 3200, 3200
      %26 = vsyncadd [#allocation6], %s25
      %s27 = sshll.u32 [#allocation5], 4
      %s28 = int_to_ptr.vmem [resolvable:$true] %s27
      %33 = dma.hbm_to_vmem [thread:$0]  %s1, 3200, %s28, [#allocation6], 64, 64, 4
    $region9: #{tpu_custom_call.1} parent=1 // pred_fallthru
      _
    // Predicated region
    $region10: #{tpu_custom_call.1} parent=1 // pred_check
      _
    $region11: #{tpu_custom_call.1} parent=1 // pred_check_branch
      %35 = sbr.rel (0) target = $region13
    $region12: #{tpu_custom_call.1} parent=1 // pred_region
      %36 = dma.done [#allocation3], 128
    $region13: #{tpu_custom_call.1} parent=1 // pred_fallthru
      _
    // Predicated region
    $region14: #{tpu_custom_call.1} parent=1 // pred_check
      _
    $region15: #{tpu_custom_call.1} parent=1 // pred_check_branch
      %38 = sbr.rel (0) target = $region17
    $region16: #{tpu_custom_call.1} parent=1 // pred_region
      %39 = dma.done [#allocation6], 3200
    $region17: #{tpu_custom_call.1} parent=1 // pred_fallthru
      _
    %v41 = vld [vmem:[#allocation2] sm:$0xf]
    %v42 = vld [vmem:[#allocation2 + $0x4] sm:$0xf]
    %v43 = vld [vmem:[#allocation5 + $0xc0] sm:$0xf]
    %v44 = vunpack.c.l.bf16 %v43
    %v45 = vld [vmem:[#allocation5] sm:$0xf]
    %v46 = vld [vmem:[#allocation5 + $0x4] sm:$0xf]
    %v47 = vld [vmem:[#allocation5 + $0x8] sm:$0xf]
    %v48 = vld [vmem:[#allocation5 + $0xc] sm:$0xf]
    %v49 = vld [vmem:[#allocation5 + $0x10] sm:$0xf]
    %v50 = vld [vmem:[#allocation5 + $0x14] sm:$0xf]
    %v51 = vlaneseq
    %v52 = vshrl.u32 %v51, 7
    %v53 = vsub.s32 0, %v52
    %v54 = vrot.slane %v44, %v53
    %v57 = vunpack.c.l.b16 %v41
    %v58 = vunpack.c.l.b16 %v42
    %v59 = vpack.c.b16 %v58, %v57
    %v66 = vunpack.c.l.b16 %v45
    %v67 = vunpack.c.l.b16 %v46
    %v68 = vunpack.c.l.b16 %v47
    %v69 = vunpack.c.l.b16 %v48
    %v70 = vunpack.c.l.b16 %v49
    %v71 = vunpack.c.l.b16 %v50
    %v72 = vpack.c.b16 %v67, %v66
    %v73 = vpack.c.b16 %v69, %v68
    %v74 = vpack.c.b16 %v71, %v70
    %vm78 = vcmask 392192
    %v80 = vsel %vm78, %v59, 0
    %82 = vmatprep.subr.bf16.mxu0 0
    %83 = vmatpush1.bf16.msra.mxu0 %v72
    %84 = vmatprep.subr.bf16.mxu0 0
    %85 = vmatpush1.bf16.msra.mxu0 %v73
    %86 = vmatprep.subr.bf16.mxu0 0
    %87 = vmatpush1.bf16.msra.mxu0 %v74
    %88 = vmatprep.subr.bf16.mxu0 0
    %89 = vmatpush1.bf16.msra.mxu0 0
    %90 = vmatprep.subr.bf16.mxu0 0
    %91 = vmatpush1.bf16.msra.mxu0 0
    %92 = vmatprep.subr.bf16.mxu0 0
    %93 = vmatpush1.bf16.msra.mxu0 0
    %94 = vmatprep.subr.bf16.mxu0 0
    %95 = vmatpush1.bf16.msra.mxu0 0
    %96 = vmatprep.subr.bf16.mxu0 0
    %97 = vmatpush1.bf16.msra.mxu0 0
    %98 = vmatprep.subr.bf16.mxu0 0
    %99 = vmatpush1.bf16.msra.mxu0 0
    %100 = vmatprep.subr.bf16.mxu0 0
    %101 = vmatpush1.bf16.msra.mxu0 0
    %102 = vmatprep.subr.bf16.mxu0 0
    %103 = vmatpush1.bf16.msra.mxu0 0
    %104 = vmatprep.subr.bf16.mxu0 0
    %105 = vmatpush1.bf16.msra.mxu0 0
    %106 = vmatprep.subr.bf16.mxu0 0
    %107 = vmatpush1.bf16.msra.mxu0 0
    %108 = vmatprep.subr.bf16.mxu0 0
    %109 = vmatpush1.bf16.msra.mxu0 0
    %110 = vmatprep.subr.bf16.mxu0 0
    %111 = vmatpush1.bf16.msra.mxu0 0
    %112 = vmatprep.subr.bf16.mxu0 0
    %113 = vmatpush1.bf16.msra.mxu0 0
    %114 = vmatprep.mubr.bf16.mxu0 0
    %115 = vmatmul.mubr.bf16.gmra.mrb[0].mxu0 %v80
    %v116 = vpop.f32.mrb[0].mxu0
    %v117 = vadd.f32 %v54, %v116
    %v118 = vpop.f32.mrb[0].mxu0
    %v119 = vpop.f32.mrb[0].mxu0
    %v120 = vadd.f32 %v54, %v119
    %v121 = vpop.f32.mrb[0].mxu0
    %122 = vdwg.mxu0
    %v123 = vmax.f32 %v117, 0.0
    %v124 = vmax.f32 %v120, 0.0
    %v125 = vld [vmem:[#allocation5 + $0x18] sm:$0xf]
    %v126 = vld [vmem:[#allocation5 + $0x1c] sm:$0xf]
    %v127 = vld [vmem:[#allocation5 + $0x20] sm:$0xf]
    %v128 = vld [vmem:[#allocation5 + $0x24] sm:$0xf]
    %v129 = vld [vmem:[#allocation5 + $0x28] sm:$0xf]
    %v130 = vld [vmem:[#allocation5 + $0x2c] sm:$0xf]
    %v131 = vpack.c.bf16 %v124, %v123
    %v132 = vld [vmem:[#allocation5 + $0x30] sm:$0xf]
    %v133 = vld [vmem:[#allocation5 + $0x34] sm:$0xf]
    %v134 = vld [vmem:[#allocation5 + $0x38] sm:$0xf]
    %v135 = vld [vmem:[#allocation5 + $0x3c] sm:$0xf]
    %v140 = vunpack.c.l.b16 %v132
    %v141 = vunpack.c.l.b16 %v133
    %v142 = vunpack.c.l.b16 %v134
    %v143 = vunpack.c.l.b16 %v135
    %v144 = vpack.c.b16 %v141, %v140
    %v145 = vpack.c.b16 %v143, %v142
    %vm148 = vcmask 261120
    %v150 = vsel %vm148, %v131, 0
    %152 = vmatprep.subr.bf16.mxu0 0
    %153 = vmatpush1.bf16.msra.mxu0 %v144
    %154 = vmatprep.subr.bf16.mxu0 0
    %155 = vmatpush1.bf16.msra.mxu0 %v145
    %156 = vmatprep.subr.bf16.mxu0 0
    %157 = vmatpush1.bf16.msra.mxu0 0
    %158 = vmatprep.subr.bf16.mxu0 0
    %159 = vmatpush1.bf16.msra.mxu0 0
    %160 = vmatprep.subr.bf16.mxu0 0
    %161 = vmatpush1.bf16.msra.mxu0 0
    %162 = vmatprep.subr.bf16.mxu0 0
    %163 = vmatpush1.bf16.msra.mxu0 0
    %164 = vmatprep.subr.bf16.mxu0 0
    %165 = vmatpush1.bf16.msra.mxu0 0
    %166 = vmatprep.subr.bf16.mxu0 0
    %167 = vmatpush1.bf16.msra.mxu0 0
    %168 = vmatprep.subr.bf16.mxu0 0
    %169 = vmatpush1.bf16.msra.mxu0 0
    %170 = vmatprep.subr.bf16.mxu0 0
    %171 = vmatpush1.bf16.msra.mxu0 0
    %172 = vmatprep.subr.bf16.mxu0 0
    %173 = vmatpush1.bf16.msra.mxu0 0
    %174 = vmatprep.subr.bf16.mxu0 0
    %175 = vmatpush1.bf16.msra.mxu0 0
    %176 = vmatprep.subr.bf16.mxu0 0
    %177 = vmatpush1.bf16.msra.mxu0 0
    %178 = vmatprep.subr.bf16.mxu0 0
    %179 = vmatpush1.bf16.msra.mxu0 0
    %180 = vmatprep.subr.bf16.mxu0 0
    %181 = vmatpush1.bf16.msra.mxu0 0
    %182 = vmatprep.subr.bf16.mxu0 0
    %183 = vmatpush1.bf16.msra.mxu0 0
    %184 = vmatprep.mubr.bf16.mxu0 0
    %185 = vmatmul.mubr.bf16.gmra.mrb[0].mxu0 %v150
    %v186 = vpop.f32.mrb[0].mxu0
    %v187 = vadd.f32 0.0, %v186
    %v188 = vpop.f32.mrb[0].mxu0
    %v189 = vpop.f32.mrb[0].mxu0
    %v190 = vadd.f32 0.0, %v189
    %v191 = vpop.f32.mrb[0].mxu0
    %192 = vdwg.mxu0
    %v199 = vunpack.c.l.b16 %v125
    %v200 = vunpack.c.l.b16 %v126
    %v201 = vunpack.c.l.b16 %v127
    %v202 = vunpack.c.l.b16 %v128
    %v203 = vunpack.c.l.b16 %v129
    %v204 = vunpack.c.l.b16 %v130
    %v205 = vpack.c.b16 %v200, %v199
    %v206 = vpack.c.b16 %v202, %v201
    %v207 = vpack.c.b16 %v204, %v203
    %211 = vmatprep.subr.bf16.mxu0 0
    %212 = vmatpush1.bf16.msra.mxu0 %v205
    %213 = vmatprep.subr.bf16.mxu0 0
    %214 = vmatpush1.bf16.msra.mxu0 %v206
    %215 = vmatprep.subr.bf16.mxu0 0
    %216 = vmatpush1.bf16.msra.mxu0 %v207
    %217 = vmatprep.subr.bf16.mxu0 0
    %218 = vmatpush1.bf16.msra.mxu0 0
    %219 = vmatprep.subr.bf16.mxu0 0
    %220 = vmatpush1.bf16.msra.mxu0 0
    %221 = vmatprep.subr.bf16.mxu0 0
    %222 = vmatpush1.bf16.msra.mxu0 0
    %223 = vmatprep.subr.bf16.mxu0 0
    %224 = vmatpush1.bf16.msra.mxu0 0
    %225 = vmatprep.subr.bf16.mxu0 0
    %226 = vmatpush1.bf16.msra.mxu0 0
    %227 = vmatprep.subr.bf16.mxu0 0
    %228 = vmatpush1.bf16.msra.mxu0 0
    %229 = vmatprep.subr.bf16.mxu0 0
    %230 = vmatpush1.bf16.msra.mxu0 0
    %231 = vmatprep.subr.bf16.mxu0 0
    %232 = vmatpush1.bf16.msra.mxu0 0
    %233 = vmatprep.subr.bf16.mxu0 0
    %234 = vmatpush1.bf16.msra.mxu0 0
    %235 = vmatprep.subr.bf16.mxu0 0
    %236 = vmatpush1.bf16.msra.mxu0 0
    %237 = vmatprep.subr.bf16.mxu0 0
    %238 = vmatpush1.bf16.msra.mxu0 0
    %239 = vmatprep.subr.bf16.mxu0 0
    %240 = vmatpush1.bf16.msra.mxu0 0
    %241 = vmatprep.subr.bf16.mxu0 0
    %242 = vmatpush1.bf16.msra.mxu0 0
    %243 = vmatprep.mubr.bf16.mxu0 0
    %244 = vmatmul.mubr.bf16.gmra.mrb[0].mxu0 %v80
    %v245 = vpop.f32.mrb[0].mxu0
    %v246 = vadd.f32 %v187, %v245
    %v247 = vpop.f32.mrb[0].mxu0
    %v248 = vpop.f32.mrb[0].mxu0
    %v249 = vadd.f32 %v190, %v248
    %v250 = vpop.f32.mrb[0].mxu0
    %251 = vdwg.mxu0
    %v252 = vlaneseq
    %v253 = vshrl.u32 %v252, 7
    %v254 = vsub.s32 1, %v253
    %v255 = vrot.slane %v44, %v254
    %v256 = vadd.f32 %v246, %v255
    %v257 = vadd.f32 %v249, %v255
    %v258 = vmax.f32 %v256, 0.0
    %v259 = vmax.f32 %v257, 0.0
    %v260 = vpack.c.bf16 %v259, %v258
    %v261 = vld [vmem:[#allocation5 + $0x40] sm:$0xf]
    %v262 = vld [vmem:[#allocation5 + $0x44] sm:$0xf]
    %v263 = vld [vmem:[#allocation5 + $0x48] sm:$0xf]
    %v264 = vld [vmem:[#allocation5 + $0x4c] sm:$0xf]
    %v265 = vld [vmem:[#allocation5 + $0x50] sm:$0xf]
    %v266 = vld [vmem:[#allocation5 + $0x54] sm:$0xf]
    %v267 = vld [vmem:[#allocation5 + $0x58] sm:$0xf]
    %v268 = vld [vmem:[#allocation5 + $0x5c] sm:$0xf]
    %v269 = vld [vmem:[#allocation5 + $0x60] sm:$0xf]
    %v270 = vld [vmem:[#allocation5 + $0x64] sm:$0xf]
    %v271 = vld [vmem:[#allocation5 + $0x68] sm:$0xf]
    %v272 = vld [vmem:[#allocation5 + $0x6c] sm:$0xf]
    %v273 = vld [vmem:[#allocation5 + $0x70] sm:$0xf]
    %v274 = vld [vmem:[#allocation5 + $0x74] sm:$0xf]
    %v275 = vld [vmem:[#allocation5 + $0x78] sm:$0xf]
    %v276 = vld [vmem:[#allocation5 + $0x7c] sm:$0xf]
    %v277 = vlaneseq
    %v278 = vshrl.u32 %v277, 7
    %v279 = vsub.s32 2, %v278
    %v280 = vrot.slane %v44, %v279
    %v297 = vunpack.c.l.b16 %v261
    %v298 = vunpack.c.l.b16 %v262
    %v299 = vunpack.c.l.b16 %v263
    %v300 = vunpack.c.l.b16 %v264
    %v301 = vunpack.c.l.b16 %v265
    %v302 = vunpack.c.l.b16 %v266
    %v303 = vunpack.c.l.b16 %v267
    %v304 = vunpack.c.l.b16 %v268
    %v305 = vunpack.c.l.b16 %v269
    %v306 = vunpack.c.l.b16 %v270
    %v307 = vunpack.c.l.b16 %v271
    %v308 = vunpack.c.l.b16 %v272
    %v309 = vunpack.c.l.b16 %v273
    %v310 = vunpack.c.l.b16 %v274
    %v311 = vunpack.c.l.b16 %v275
    %v312 = vunpack.c.l.b16 %v276
    %v313 = vpack.c.b16 %v298, %v297
    %v314 = vpack.c.b16 %v300, %v299
    %v315 = vpack.c.b16 %v302, %v301
    %v316 = vpack.c.b16 %v304, %v303
    %v317 = vpack.c.b16 %v306, %v305
    %v318 = vpack.c.b16 %v308, %v307
    %v319 = vpack.c.b16 %v310, %v309
    %v320 = vpack.c.b16 %v312, %v311
    %329 = vmatprep.subr.bf16.mxu0 0
    %330 = vmatpush1.bf16.msra.mxu0 %v313
    %331 = vmatprep.subr.bf16.mxu0 0
    %332 = vmatpush1.bf16.msra.mxu0 %v314
    %333 = vmatprep.subr.bf16.mxu0 0
    %334 = vmatpush1.bf16.msra.mxu0 %v315
    %335 = vmatprep.subr.bf16.mxu0 0
    %336 = vmatpush1.bf16.msra.mxu0 %v316
    %337 = vmatprep.subr.bf16.mxu0 0
    %338 = vmatpush1.bf16.msra.mxu0 %v317
    %339 = vmatprep.subr.bf16.mxu0 0
    %340 = vmatpush1.bf16.msra.mxu0 %v318
    %341 = vmatprep.subr.bf16.mxu0 0
    %342 = vmatpush1.bf16.msra.mxu0 %v319
    %343 = vmatprep.subr.bf16.mxu0 0
    %344 = vmatpush1.bf16.msra.mxu0 %v320
    %345 = vmatprep.subr.bf16.mxu0 0
    %346 = vmatpush1.bf16.msra.mxu0 0
    %347 = vmatprep.subr.bf16.mxu0 0
    %348 = vmatpush1.bf16.msra.mxu0 0
    %349 = vmatprep.subr.bf16.mxu0 0
    %350 = vmatpush1.bf16.msra.mxu0 0
    %351 = vmatprep.subr.bf16.mxu0 0
    %352 = vmatpush1.bf16.msra.mxu0 0
    %353 = vmatprep.subr.bf16.mxu0 0
    %354 = vmatpush1.bf16.msra.mxu0 0
    %355 = vmatprep.subr.bf16.mxu0 0
    %356 = vmatpush1.bf16.msra.mxu0 0
    %357 = vmatprep.subr.bf16.mxu0 0
    %358 = vmatpush1.bf16.msra.mxu0 0
    %359 = vmatprep.subr.bf16.mxu0 0
    %360 = vmatpush1.bf16.msra.mxu0 0
    %361 = vmatprep.mubr.bf16.mxu0 0
    %362 = vmatmul.mubr.bf16.gmra.mrb[0].mxu0 %v260
    %v363 = vpop.f32.mrb[0].mxu0
    %v364 = vadd.f32 %v280, %v363
    %v365 = vpop.f32.mrb[0].mxu0
    %v366 = vpop.f32.mrb[0].mxu0
    %v367 = vadd.f32 %v280, %v366
    %v368 = vpop.f32.mrb[0].mxu0
    %369 = vdwg.mxu0
    %v370 = vmax.f32 %v364, 0.0
    %v371 = vmax.f32 %v367, 0.0
    %v372 = vrot.slane %v370, 4
    %v373 = vmax.f32 %v370, %v372
    %v374 = vrot.slane %v373, 2
    %v375 = vmax.f32 %v373, %v374
    %v376 = vrot.slane %v375, 1
    %v377 = vmax.f32 %v375, %v376
    %v378 = vrot.slane %v371, 4
    %v379 = vmax.f32 %v371, %v378
    %v380 = vrot.slane %v379, 2
    %v381 = vmax.f32 %v379, %v380
    %v382 = vrot.slane %v381, 1
    %v383 = vmax.f32 %v381, %v382
    %v384 = vpack.c.bf16 %v377, %v377
    %v385 = vpack.c.bf16 %v383, %v383
    %v386 = vld [vmem:[#allocation5 + $0x80] sm:$0xf]
    %v387 = vld [vmem:[#allocation5 + $0x84] sm:$0xf]
    %v388 = vld [vmem:[#allocation5 + $0x88] sm:$0xf]
    %v389 = vld [vmem:[#allocation5 + $0x8c] sm:$0xf]
    %v390 = vld [vmem:[#allocation5 + $0x90] sm:$0xf]
    %v391 = vld [vmem:[#allocation5 + $0x94] sm:$0xf]
    %v392 = vld [vmem:[#allocation5 + $0x98] sm:$0xf]
    %v393 = vld [vmem:[#allocation5 + $0x9c] sm:$0xf]
    %v394 = vlaneseq
    %v395 = vshrl.u32 %v394, 7
    %v396 = vsub.s32 3, %v395
    %v397 = vrot.slane %v44, %v396
    %v400 = vunpack.c.l.b16 %v384
    %v401 = vunpack.c.l.b16 %v385
    %vm402 = vcmask 1041409
    %v403 = vsel %vm402, %v401, %v400
    %v404 = vpack.c.b16 %v403, %v403
    %v413 = vunpack.c.l.b16 %v386
    %v414 = vunpack.c.l.b16 %v387
    %v415 = vunpack.c.l.b16 %v388
    %v416 = vunpack.c.l.b16 %v389
    %v417 = vunpack.c.l.b16 %v390
    %v418 = vunpack.c.l.b16 %v391
    %v419 = vunpack.c.l.b16 %v392
    %v420 = vunpack.c.l.b16 %v393
    %v421 = vpack.c.b16 %v414, %v413
    %v422 = vpack.c.b16 %v416, %v415
    %v423 = vpack.c.b16 %v418, %v417
    %v424 = vpack.c.b16 %v420, %v419
    %vm429 = vcmask 523264
    %v431 = vsel %vm429, %v404, 0
    %433 = vmatprep.subr.bf16.mxu0 0
    %434 = vmatpush1.bf16.msra.mxu0 %v421
    %435 = vmatprep.subr.bf16.mxu0 0
    %436 = vmatpush1.bf16.msra.mxu0 %v422
    %437 = vmatprep.subr.bf16.mxu0 0
    %438 = vmatpush1.bf16.msra.mxu0 %v423
    %439 = vmatprep.subr.bf16.mxu0 0
    %440 = vmatpush1.bf16.msra.mxu0 %v424
    %441 = vmatprep.subr.bf16.mxu0 0
    %442 = vmatpush1.bf16.msra.mxu0 0
    %443 = vmatprep.subr.bf16.mxu0 0
    %444 = vmatpush1.bf16.msra.mxu0 0
    %445 = vmatprep.subr.bf16.mxu0 0
    %446 = vmatpush1.bf16.msra.mxu0 0
    %447 = vmatprep.subr.bf16.mxu0 0
    %448 = vmatpush1.bf16.msra.mxu0 0
    %449 = vmatprep.subr.bf16.mxu0 0
    %450 = vmatpush1.bf16.msra.mxu0 0
    %451 = vmatprep.subr.bf16.mxu0 0
    %452 = vmatpush1.bf16.msra.mxu0 0
    %453 = vmatprep.subr.bf16.mxu0 0
    %454 = vmatpush1.bf16.msra.mxu0 0
    %455 = vmatprep.subr.bf16.mxu0 0
    %456 = vmatpush1.bf16.msra.mxu0 0
    %457 = vmatprep.subr.bf16.mxu0 0
    %458 = vmatpush1.bf16.msra.mxu0 0
    %459 = vmatprep.subr.bf16.mxu0 0
    %460 = vmatpush1.bf16.msra.mxu0 0
    %461 = vmatprep.subr.bf16.mxu0 0
    %462 = vmatpush1.bf16.msra.mxu0 0
    %463 = vmatprep.subr.bf16.mxu0 0
    %464 = vmatpush1.bf16.msra.mxu0 0
    %465 = vmatprep.mubr.bf16.mxu0 0
    %466 = vmatmul.mubr.bf16.gmra.mrb[0].mxu0 %v431
    %v467 = vpop.f32.mrb[0].mxu0
    %v468 = vadd.f32 %v397, %v467
    %v469 = vpop.f32.mrb[0].mxu0
    %v470 = vpop.f32.mrb[0].mxu0
    %v471 = vpop.f32.mrb[0].mxu0
    %472 = vdwg.mxu0
    %v473 = vmax.f32 %v468, 0.0
    %v474 = vpack.c.bf16 %v473, %v473
    %v475 = vld [vmem:[#allocation5 + $0xa0] sm:$0xf]
    %v476 = vld [vmem:[#allocation5 + $0xa4] sm:$0xf]
    %v477 = vld [vmem:[#allocation5 + $0xa8] sm:$0xf]
    %v478 = vld [vmem:[#allocation5 + $0xac] sm:$0xf]
    %v479 = vld [vmem:[#allocation5 + $0xb0] sm:$0xf]
    %v480 = vld [vmem:[#allocation5 + $0xb4] sm:$0xf]
    %v481 = vld [vmem:[#allocation5 + $0xb8] sm:$0xf]
    %v482 = vld [vmem:[#allocation5 + $0xbc] sm:$0xf]
    %v483 = vlaneseq
    %v484 = vshrl.u32 %v483, 7
    %v485 = vsub.s32 4, %v484
    %v486 = vrot.slane %v44, %v485
    %v495 = vunpack.c.l.b16 %v475
    %v496 = vunpack.c.l.b16 %v476
    %v497 = vunpack.c.l.b16 %v477
    %v498 = vunpack.c.l.b16 %v478
    %v499 = vunpack.c.l.b16 %v479
    %v500 = vunpack.c.l.b16 %v480
    %v501 = vunpack.c.l.b16 %v481
    %v502 = vunpack.c.l.b16 %v482
    %v503 = vpack.c.b16 %v496, %v495
    %v504 = vpack.c.b16 %v498, %v497
    %v505 = vpack.c.b16 %v500, %v499
    %v506 = vpack.c.b16 %v502, %v501
    %v512 = vsel %vm429, %v474, 0
    %514 = vmatprep.subr.bf16.mxu0 0
    %515 = vmatpush1.bf16.msra.mxu0 %v503
    %516 = vmatprep.subr.bf16.mxu0 0
    %517 = vmatpush1.bf16.msra.mxu0 %v504
    %518 = vmatprep.subr.bf16.mxu0 0
    %519 = vmatpush1.bf16.msra.mxu0 %v505
    %520 = vmatprep.subr.bf16.mxu0 0
    %521 = vmatpush1.bf16.msra.mxu0 %v506
    %522 = vmatprep.subr.bf16.mxu0 0
    %523 = vmatpush1.bf16.msra.mxu0 0
    %524 = vmatprep.subr.bf16.mxu0 0
    %525 = vmatpush1.bf16.msra.mxu0 0
    %526 = vmatprep.subr.bf16.mxu0 0
    %527 = vmatpush1.bf16.msra.mxu0 0
    %528 = vmatprep.subr.bf16.mxu0 0
    %529 = vmatpush1.bf16.msra.mxu0 0
    %530 = vmatprep.subr.bf16.mxu0 0
    %531 = vmatpush1.bf16.msra.mxu0 0
    %532 = vmatprep.subr.bf16.mxu0 0
    %533 = vmatpush1.bf16.msra.mxu0 0
    %534 = vmatprep.subr.bf16.mxu0 0
    %535 = vmatpush1.bf16.msra.mxu0 0
    %536 = vmatprep.subr.bf16.mxu0 0
    %537 = vmatpush1.bf16.msra.mxu0 0
    %538 = vmatprep.subr.bf16.mxu0 0
    %539 = vmatpush1.bf16.msra.mxu0 0
    %540 = vmatprep.subr.bf16.mxu0 0
    %541 = vmatpush1.bf16.msra.mxu0 0
    %542 = vmatprep.subr.bf16.mxu0 0
    %543 = vmatpush1.bf16.msra.mxu0 0
    %544 = vmatprep.subr.bf16.mxu0 0
    %545 = vmatpush1.bf16.msra.mxu0 0
    %546 = vmatprep.mubr.bf16.mxu0 0
    %547 = vmatmul.mubr.bf16.gmra.mrb[0].mxu0 %v512
    %v548 = vpop.f32.mrb[0].mxu0
    %v549 = vadd.f32 %v486, %v548
    %v550 = vpop.f32.mrb[0].mxu0
    %v551 = vpop.f32.mrb[0].mxu0
    %v552 = vpop.f32.mrb[0].mxu0
    %553 = vdwg.mxu0
    %554 = vst [vmem:[#allocation7] sm:$0x3] %v549
    // Predicated region
    $region18: #{tpu_custom_call.1} parent=1 // pred_check
      _
    $region19: #{tpu_custom_call.1} parent=1 // pred_check_branch
      %556 = sbr.rel (0) target = $region21
    $region20: #{tpu_custom_call.1} parent=1 // pred_region
      %s558 = ssub.s32 32, 32
      %559 = vsyncadd [#allocation4], %s558
      %s561 = sshll.u32 [#allocation7], 4
      %s562 = int_to_ptr.vmem [resolvable:$true] %s561
      %564 = dma.vmem_to_hbm [thread:$0]  %s562, 32, %s2, [#allocation4]
    $region21: #{tpu_custom_call.1} parent=1 // pred_fallthru
      _
    // Predicated region
    $region22: #{tpu_custom_call.1} parent=1 // pred_check
      _
    $region23: #{tpu_custom_call.1} parent=1 // pred_check_branch
      %566 = sbr.rel (0) target = $region25
    $region24: #{tpu_custom_call.1} parent=1 // pred_region
      %567 = dma.done [#allocation4], 32
    $region25: #{tpu_custom_call.1} parent=1 // pred_fallthru
      _
    %568 = vsyncpa [#allocation3], 1
    %569 = vsyncpa [#allocation6], 1
    %570 = vsyncpa [#allocation4], 1

</llo_original>
